<compile_context>
chip_gen: v7x
topology: tpu7x:2x2x1
jax: 0.10.0
libtpu: 0.0.40
codegen_flags: <defaults>
</compile_context>

<pallas_src>
import jax
import jax.numpy as jnp
import numpy as np
from jax.experimental import pallas as pl
from jax.experimental.pallas import tpu as pltpu

_LANES = 128
_SUBLANES = 8


def _y_kernel(params_ref, x_ref, y_ref, o_ref):
    # params_ref: SMEM (4,) f32 = [alpha, beta, 2*pi*sigma^2, 1/(2*sigma^2)]
    alpha = params_ref[0]
    beta = params_ref[1]
    two_pi_sigma2 = params_ref[2]
    inv_two_sigma2 = params_ref[3]

    # Upcast in-register; inputs stay in their native dtype in HBM/VMEM.
    x = x_ref[...].astype(jnp.float32)
    y = y_ref[...].astype(jnp.float32)

    # pred = alpha + beta * x ; diff = y - pred
    diff = y - (alpha + beta * x)
    # -0.5 * log(2*pi*sigma^2 + diff^2 / (2*sigma^2))
    o_ref[...] = -0.5 * jnp.log(two_pi_sigma2 + (diff * diff) * inv_two_sigma2)


def _round_up(n, m):
    return ((n + m - 1) // m) * m


def _choose_tile_rows(rows, max_tile_rows):
    """Largest 8-aligned tile <= max_tile_rows that still yields >= 2 grid steps
    when possible (keeps both v7x TensorCores busy)."""
    half = _round_up(pl.cdiv(rows, 2), _SUBLANES)
    return max(_SUBLANES, min(max_tile_rows, half))


def _y_reference(x, y, alpha, beta, sigma):
    xf = x.astype(jnp.float32)
    yf = y.astype(jnp.float32)
    alpha_f = jnp.asarray(alpha, jnp.float32)
    beta_f = jnp.asarray(beta, jnp.float32)
    sigma_f = jnp.asarray(sigma, jnp.float32)
    pred = alpha_f + beta_f * xf
    return -0.5 * jnp.log(
        jnp.float32(2.0 * np.pi) * sigma_f ** 2 + (yf - pred) ** 2 / 2.0 / sigma_f ** 2
    )


def y_forward(x, y, alpha, beta, sigma, *, max_tile_rows=8192, use_pallas=None):
    """Forward of module Y: -0.5*log(2*pi*sigma^2 + (y - (alpha+beta*x))^2/(2*sigma^2))."""
    assert x.shape == y.shape, "x and y must have the same shape"
    orig_shape = x.shape
    n_elem = int(np.prod(orig_shape)) if len(orig_shape) else 1

    if use_pallas is None:
        # Tiny inputs: pallas_call / DMA setup overhead dominates; let XLA fuse it.
        use_pallas = n_elem * 4 >= (1 << 20)
    if not use_pallas:
        return _y_reference(x, y, alpha, beta, sigma)

    # Flatten to a lane-dense (rows, 128) view, padding up to an (8,128) tile.
    flat_x = x.reshape(-1)
    flat_y = y.reshape(-1)
    padded = _round_up(n_elem, _SUBLANES * _LANES)
    if padded != n_elem:
        flat_x = jnp.pad(flat_x, (0, padded - n_elem))
        flat_y = jnp.pad(flat_y, (0, padded - n_elem))
    rows = padded // _LANES
    x2 = flat_x.reshape(rows, _LANES)  # native dtype -- no wrapper-side f32 cast
    y2 = flat_y.reshape(rows, _LANES)

    # All scalar math hoisted off the vector path (done once, outside the kernel).
    sigma_f = jnp.asarray(sigma, jnp.float32)
    sigma2 = sigma_f * sigma_f
    params = jnp.stack(
        [
            jnp.asarray(alpha, jnp.float32),
            jnp.asarray(beta, jnp.float32),
            jnp.float32(2.0 * np.pi) * sigma2,  # 2*pi*sigma^2
            jnp.float32(0.5) / sigma2,          # 1/(2*sigma^2)
        ]
    )

    tile_rows = _choose_tile_rows(rows, max_tile_rows)
    grid = (pl.cdiv(rows, tile_rows),)  # partial last block handled by Pallas

    # Scoped-VMEM budget: (x + y + out) tiles x double buffering + headroom.
    # Explicit because v5e's scoped default is only 16 MiB; capped well under
    # v7x's 64 MiB/TC physical VMEM.
    bytes_per_row = _LANES * (x2.dtype.itemsize + y2.dtype.itemsize + 4)
    footprint = 2 * tile_rows * bytes_per_row
    vmem_limit_bytes = int(min(max(footprint + (8 << 20), 32 << 20), 56 << 20))

    out = pl.pallas_call(
        _y_kernel,
        out_shape=jax.ShapeDtypeStruct((rows, _LANES), jnp.float32),
        grid_spec=pltpu.PrefetchScalarGridSpec(
            num_scalar_prefetch=0,
            grid=grid,
            in_specs=[
                pl.BlockSpec(memory_space=pltpu.SMEM),                # params (scalars)
                pl.BlockSpec((tile_rows, _LANES), lambda i: (i, 0)),  # x
                pl.BlockSpec((tile_rows, _LANES), lambda i: (i, 0)),  # y
            ],
            out_specs=pl.BlockSpec((tile_rows, _LANES), lambda i: (i, 0)),
        ),
        compiler_params=pltpu.CompilerParams(
            # NOTE: on v7x, pltpu.CORE_PARALLEL would shard these steps across both
            # TensorCores; plain "parallel" is kept for portability on v5e/v6e.
            dimension_semantics=("parallel",),
            vmem_limit_bytes=vmem_limit_bytes,
        ),
    )(params, x2, y2)

    out_flat = out.reshape(-1)
    if padded != n_elem:
        out_flat = out_flat[:n_elem]
    return out_flat.reshape(orig_shape)


if __name__ == "__main__":
    # Deterministic parameter init, mirroring the module's __init__:
    # alpha = 1.0, beta = 1.0, sigma = 1.0
    alpha, beta, sigma = 1.0, 1.0, 1.0

    key = jax.random.PRNGKey(0)
    kx, ky = jax.random.split(key)
    shape = (2, 4, 16, 16)  # NCHW-style example input
    x = jax.random.normal(kx, shape, dtype=jnp.float32)
    y = jax.random.normal(ky, shape, dtype=jnp.float32)

    # Force the Pallas path so the kernel itself is exercised on this small input.
    out = y_forward(x, y, alpha, beta, sigma, use_pallas=True)
    out = jax.block_until_ready(out)

    ref = _y_reference(x, y, alpha, beta, sigma)
    assert jnp.allclose(out, ref, atol=1e-5, rtol=1e-5), "mismatch vs reference"

    # Auto path (tiny input -> fused jnp fast path) must match too.
    out_auto = jax.block_until_ready(y_forward(x, y, alpha, beta, sigma))
    assert jnp.allclose(out_auto, ref, atol=1e-5, rtol=1e-5), "fast-path mismatch"

    # Robustness: awkward shape (not a multiple of 128 -> padded) and a shape
    # whose row count is not a multiple of the tile (partial last block).
    for odd_shape in [(3, 5, 7), (2, 12, 128)]:
        kx2, ky2 = jax.random.split(jax.random.PRNGKey(1), 2)
        xo = jax.random.normal(kx2, odd_shape, dtype=jnp.float32)
        yo = jax.random.normal(ky2, odd_shape, dtype=jnp.float32)
        oo = jax.block_until_ready(
            y_forward(xo, yo, alpha, beta, sigma, use_pallas=True)
        )
        ro = _y_reference(xo, yo, alpha, beta, sigma)
        assert jnp.allclose(oo, ro, atol=1e-5, rtol=1e-5), f"mismatch at {odd_shape}"

    print("KERNEL_OK")
</pallas_src>

<mosaic_0001>
module attributes {stable_mosaic.version = 11 : i64} {
  func.func @_y_kernel(%arg0: i32, %arg1: memref<4xf32, #tpu.memory_space<smem>>, %arg2: memref<8x128xf32, #tpu.memory_space<vmem>>, %arg3: memref<8x128xf32, #tpu.memory_space<vmem>>, %arg4: memref<8x128xf32, #tpu.memory_space<vmem>>) attributes {dimension_semantics = [#tpu.dimension_semantics<parallel>], iteration_bounds = array<i64: 2>, scalar_prefetch = 0 : i64, scratch_operands = 0 : i64, tpu.core_type = #tpu.core_type<tc>, window_params = [{transform_indices = @transform_0, window_bounds = array<i64: 4>}, {transform_indices = @transform_1, window_bounds = array<i64: 8, 128>}, {transform_indices = @transform_2, window_bounds = array<i64: 8, 128>}, {transform_indices = @transform_3, window_bounds = array<i64: 8, 128>}]} {
    %c0 = arith.constant 0 : index
    %0 = memref.load %arg1[%c0] : memref<4xf32, #tpu.memory_space<smem>>
    %c1 = arith.constant 1 : index
    %1 = memref.load %arg1[%c1] : memref<4xf32, #tpu.memory_space<smem>>
    %c2 = arith.constant 2 : index
    %2 = memref.load %arg1[%c2] : memref<4xf32, #tpu.memory_space<smem>>
    %c3 = arith.constant 3 : index
    %3 = memref.load %arg1[%c3] : memref<4xf32, #tpu.memory_space<smem>>
    %c0_0 = arith.constant 0 : index
    %c0_1 = arith.constant 0 : index
    %4 = vector.load %arg2[%c0_0, %c0_1] : memref<8x128xf32, #tpu.memory_space<vmem>>, vector<8x128xf32>
    %c0_2 = arith.constant 0 : index
    %c0_3 = arith.constant 0 : index
    %5 = vector.load %arg3[%c0_2, %c0_3] : memref<8x128xf32, #tpu.memory_space<vmem>>, vector<8x128xf32>
    %6 = vector.broadcast %1 : f32 to vector<8x128xf32>
    %7 = arith.mulf %6, %4 : vector<8x128xf32>
    %8 = vector.broadcast %0 : f32 to vector<8x128xf32>
    %9 = arith.addf %8, %7 : vector<8x128xf32>
    %10 = arith.subf %5, %9 : vector<8x128xf32>
    %11 = arith.mulf %10, %10 : vector<8x128xf32>
    %12 = vector.broadcast %3 : f32 to vector<8x128xf32>
    %13 = arith.mulf %11, %12 : vector<8x128xf32>
    %14 = vector.broadcast %2 : f32 to vector<8x128xf32>
    %15 = arith.addf %14, %13 : vector<8x128xf32>
    %16 = math.log %15 : vector<8x128xf32>
    %cst = arith.constant -5.000000e-01 : f32
    %17 = vector.broadcast %cst : f32 to vector<8x128xf32>
    %18 = arith.mulf %17, %16 : vector<8x128xf32>
    %c0_4 = arith.constant 0 : index
    %c0_5 = arith.constant 0 : index
    %19 = vector.load %arg4[%c0_4, %c0_5] : memref<8x128xf32, #tpu.memory_space<vmem>>, vector<8x128xf32>
    tpu.vector_store %arg4[%c0_4, %c0_5], %18 {strides = array<i32>} : memref<8x128xf32, #tpu.memory_space<vmem>>, vector<8x128xf32>,
    return
  }
  func.func @transform_0(%arg0: i32) -> i32 {
    %c0_i32 = arith.constant 0 : i32
    %c0_i32_0 = arith.constant 0 : i32
    return %c0_i32 : i32
  }
  func.func @transform_1(%arg0: i32) -> (i32, i32) {
    %c0_i32 = arith.constant 0 : i32
    %c0_i32_0 = arith.constant 0 : i32
    return %arg0, %c0_i32 : i32, i32
  }
  func.func @transform_2(%arg0: i32) -> (i32, i32) {
    %c0_i32 = arith.constant 0 : i32
    %c0_i32_0 = arith.constant 0 : i32
    return %arg0, %c0_i32 : i32, i32
  }
  func.func @transform_3(%arg0: i32) -> (i32, i32) {
    %c0_i32 = arith.constant 0 : i32
    %c0_i32_0 = arith.constant 0 : i32
    return %arg0, %c0_i32 : i32, i32
  }
}

</mosaic_0001>

<llo_original>
// kernel: tpu_custom_call.1
$region0: #{tpu_custom_call.1}
  #allocation0 [shape = 'u32[]', space=smem, size = 0x4, offset = 0x4, fixed_abs, tag = 'smem constant byte address 0x4 - core index']
  #allocation1 [shape = 'u32[144,128]{1,0:T(1,128)}', space=vmem, size = 0x12000, scoped, tag = 'internal scratch']
  %s0 = inlined_call_operand.hbm [shape: f32[4], index: 0, kind: input, shape index: {}]
  %s1 = inlined_call_operand.hbm [shape: f32[16,128], index: 1, kind: input, shape index: {}]
  %s2 = inlined_call_operand.hbm [shape: f32[16,128], index: 2, kind: input, shape index: {}]
  %s3 = inlined_call_operand.hbm [shape: f32[16,128], index: 3, kind: output, shape index: {}]
  %s4 = sld [smem:[#allocation0]]
  $region57: #{tpu_custom_call.1} parent=0
    _
  %s6 = ssub.s32 1, %s4
  %s7 = scalar_select 0, %s6, %s4
  $region1: #{tpu_custom_call.1} parent=0
    #allocation2 [shape = 'u8[512]{0}', space=smem, size = 0x200, scoped, tag = 'input window, operand 0, single buffered']
    #allocation3 [shape = 's32[2]{0}', space=sflag, size = 0x8, scoped, tag = 'scoped memory for tpu_custom_call.1']
    #allocation4 [shape = 's32[2]{0}', space=sflag, size = 0x8, scoped, tag = 'scoped memory for tpu_custom_call.1']
    #allocation5 [shape = 's32[2]{0}', space=sflag, size = 0x8, scoped, tag = 'scoped memory for tpu_custom_call.1']
    #allocation6 [shape = 'u8[8192]{0}', space=vmem, size = 0x2000, scoped, tag = 'input window, operand 1']
    #allocation7 [shape = 'u8[8192]{0}', space=vmem, size = 0x2000, scoped, tag = 'input window, operand 2']
    #allocation8 [shape = 's32[2]{0}', space=sflag, size = 0x8, scoped, tag = 'scoped memory for tpu_custom_call.1']
    #allocation9 [shape = 'u8[8192]{0}', space=vmem, size = 0x2000, scoped, tag = 'output window, operand 0']
    %8 = vsyncpa [#allocation5], 0
    %9 = vsyncpa [#allocation3], 0
    %s10 = scalar_lea.sflag [#allocation3], 1
    %11 = vsyncpa %s10, 0
    %12 = vsyncpa [#allocation8], 0
    %s13 = scalar_lea.sflag [#allocation8], 1
    %14 = vsyncpa %s13, 0
    %15 = vsyncpa [#allocation4], 0
    %s16 = scalar_lea.sflag [#allocation4], 1
    %17 = vsyncpa %s16, 0
    loop: start=0, step=1, limit=4
    $region2: #{tpu_custom_call.1} parent=1 // loop_pre_header
      _
    $region3: #{tpu_custom_call.1} parent=1 // loop_header
      %s19 = sphi 0, %s23
      %p20 = scmp.ge.s32.totalorder %s19, 4
      %s27 = sphi 0, %s27
      %s29 = sphi 0, %s27
      %s30 = sphi 0, %s29
      %s44 = sphi 0, %s30
      %s50 = sphi 0, %s52
      %s53 = sphi 0, %s50
      %s54 = sphi 0, %s53
      %s70 = sphi 0, %s54
      %s76 = sphi 0, %s78
      %s79 = sphi 0, %s76
      %s80 = sphi 0, %s79
      %s96 = sphi 0, %s80
      %s102 = sphi 0, %s104
      %s105 = sphi 0, %s102
      %s106 = sphi 0, %s105
      %s122 = sphi 0, %s106
    $region4: #{tpu_custom_call.1} parent=1 // loop_header_branch
      %22 = sbr.rel (%p20) target = $region8
    $region5: #{tpu_custom_call.1} parent=1 // loop_body
      %s24 = ssub.s32 %s19, 1
      %s25 = ssub.s32 %s19, 2
      %s26 = sadd.s32 %s19, 1
      %s28 = sadd.s32 %s27, 1
      %p31 = scmp.eq.s32.totalorder %s19, 1
      %p32 = scmp.ne.s32.totalorder %s27, %s29
      %p33 = scmp.eq.s32.totalorder %s19, 0
      %p34 = por %p32, %p33
      %p35 = scmp.ne.s32.totalorder %s27, %s29
      %p36 = scmp.eq.s32.totalorder %s24, 1
      %p37 = por %p35, %p36
      %p38 = scmp.ne.s32.totalorder %s29, %s30
      %p39 = scmp.eq.s32.totalorder %s24, 0
      %p40 = por %p38, %p39
      %p41 = scmp.ne.s32.totalorder %s29, %s30
      %p42 = scmp.eq.s32.totalorder %s25, 1
      %p43 = por %p41, %p42
      %p45 = scmp.ne.s32.totalorder %s30, %s44
      %p46 = scmp.eq.s32.totalorder %s25, 0
      %p47 = por %p45, %p46
      %s48 = ssub.s32 %s19, %s26
      %p49 = scmp.eq.s32.totalorder %s48, 0
      %s51 = sadd.s32 %s50, 1
      %s52 = scalar_select %p49, %s50, %s51
      %p55 = pneg %p49
      %p56 = scmp.eq.s32.totalorder %s19, 1
      %p57 = por %p55, %p56
      %p58 = scmp.ne.s32.totalorder %s50, %s53
      %p59 = scmp.eq.s32.totalorder %s19, 0
      %p60 = por %p58, %p59
      %p61 = scmp.ne.s32.totalorder %s50, %s53
      %p62 = scmp.eq.s32.totalorder %s24, 1
      %p63 = por %p61, %p62
      %p64 = scmp.ne.s32.totalorder %s53, %s54
      %p65 = scmp.eq.s32.totalorder %s24, 0
      %p66 = por %p64, %p65
      %p67 = scmp.ne.s32.totalorder %s53, %s54
      %p68 = scmp.eq.s32.totalorder %s25, 1
      %p69 = por %p67, %p68
      %p71 = scmp.ne.s32.totalorder %s54, %s70
      %p72 = scmp.eq.s32.totalorder %s25, 0
      %p73 = por %p71, %p72
      %s74 = ssub.s32 %s19, %s26
      %p75 = scmp.eq.s32.totalorder %s74, 0
      %s77 = sadd.s32 %s76, 1
      %s78 = scalar_select %p75, %s76, %s77
      %p81 = pneg %p75
      %p82 = scmp.eq.s32.totalorder %s19, 1
      %p83 = por %p81, %p82
      %p84 = scmp.ne.s32.totalorder %s76, %s79
      %p85 = scmp.eq.s32.totalorder %s19, 0
      %p86 = por %p84, %p85
      %p87 = scmp.ne.s32.totalorder %s76, %s79
      %p88 = scmp.eq.s32.totalorder %s24, 1
      %p89 = por %p87, %p88
      %p90 = scmp.ne.s32.totalorder %s79, %s80
      %p91 = scmp.eq.s32.totalorder %s24, 0
      %p92 = por %p90, %p91
      %p93 = scmp.ne.s32.totalorder %s79, %s80
      %p94 = scmp.eq.s32.totalorder %s25, 1
      %p95 = por %p93, %p94
      %p97 = scmp.ne.s32.totalorder %s80, %s96
      %p98 = scmp.eq.s32.totalorder %s25, 0
      %p99 = por %p97, %p98
      %s100 = ssub.s32 %s19, %s26
      %p101 = scmp.eq.s32.totalorder %s100, 0
      %s103 = sadd.s32 %s102, 1
      %s104 = scalar_select %p101, %s102, %s103
      %p107 = pneg %p101
      %p108 = scmp.eq.s32.totalorder %s19, 1
      %p109 = por %p107, %p108
      %p110 = scmp.ne.s32.totalorder %s102, %s105
      %p111 = scmp.eq.s32.totalorder %s19, 0
      %p112 = por %p110, %p111
      %p113 = scmp.ne.s32.totalorder %s102, %s105
      %p114 = scmp.eq.s32.totalorder %s24, 1
      %p115 = por %p113, %p114
      %p116 = scmp.ne.s32.totalorder %s105, %s106
      %p117 = scmp.eq.s32.totalorder %s24, 0
      %p118 = por %p116, %p117
      %p119 = scmp.ne.s32.totalorder %s105, %s106
      %p120 = scmp.eq.s32.totalorder %s25, 1
      %p121 = por %p119, %p120
      %p123 = scmp.ne.s32.totalorder %s106, %s122
      %p124 = scmp.eq.s32.totalorder %s25, 0
      %p125 = por %p123, %p124
      %p126 = scmp.le.s32.totalorder 1, %s19
      %p127 = scmp.lt.s32.totalorder %s19, 3
      %p128 = pnand %p126, %p127
      %p129 = pneg %p128
      // Predicated region
      $region9: #{tpu_custom_call.1} parent=5 // pred_check
        _
      $region10: #{tpu_custom_call.1} parent=5 // pred_check_branch
        %131 = sbr.rel (%p128) target = $region12
      $region11: #{tpu_custom_call.1} parent=5 // pred_region
        %s132 = ssub.s32 %s19, 1
        // Predicated region
        $region13: #{tpu_custom_call.1} parent=11 // pred_check
          %p133 = pneg %p40
        $region14: #{tpu_custom_call.1} parent=11 // pred_check_branch
          %135 = sbr.rel (%p133) target = $region16
        $region15: #{tpu_custom_call.1} parent=11 // pred_region
          %s137 = ssub.s32 16, 16
          %138 = vsyncadd [#allocation5], %s137
          %141 = dma.hbm_to_smem %s0, 16, [#allocation2], [#allocation5]
        $region16: #{tpu_custom_call.1} parent=11 // pred_fallthru
          _
      $region12: #{tpu_custom_call.1} parent=5 // pred_fallthru
        _
      %p142 = scmp.lt.s32.totalorder %s19, 2
      // Predicated region
      $region17: #{tpu_custom_call.1} parent=5 // pred_check
        %p143 = pneg %p142
      $region18: #{tpu_custom_call.1} parent=5 // pred_check_branch
        %145 = sbr.rel (%p143) target = $region20
      $region19: #{tpu_custom_call.1} parent=5 // pred_region
        // Predicated region
        $region21: #{tpu_custom_call.1} parent=19 // pred_check
          %p146 = pneg %p60
        $region22: #{tpu_custom_call.1} parent=19 // pred_check_branch
          %148 = sbr.rel (%p146) target = $region24
        $region23: #{tpu_custom_call.1} parent=19 // pred_region
          %s149 = sand.u32 %s50, 1
          %s150 = scalar_lea.sflag [#allocation3], %s149
          %s151 = sand.u32 %s50, 1
          %s152 = smul.addr %s151, 8
          %s153 = scalar_lea.vmem [#allocation6], %s152
          %s155 = ssub.s32 128, 128
          %156 = vsyncadd %s150, %s155
          %s157 = smul.addr %s19, 128
          %s158 = scalar_lea.hbm %s1, %s157
          %s160 = sshll.u32 %s153, 4
          %s161 = int_to_ptr.vmem [resolvable:$true] %s160
          %163 = dma.hbm_to_vmem [thread:$0]  %s158, 128, %s161, %s150
        $region24: #{tpu_custom_call.1} parent=19 // pred_fallthru
          _
        // Predicated region
        $region25: #{tpu_custom_call.1} parent=19 // pred_check
          %p164 = pneg %p86
        $region26: #{tpu_custom_call.1} parent=19 // pred_check_branch
          %166 = sbr.rel (%p164) target = $region28
        $region27: #{tpu_custom_call.1} parent=19 // pred_region
          %s167 = sand.u32 %s76, 1
          %s168 = scalar_lea.sflag [#allocation8], %s167
          %s169 = sand.u32 %s76, 1
          %s170 = smul.addr %s169, 8
          %s171 = scalar_lea.vmem [#allocation7], %s170
          %s173 = ssub.s32 128, 128
          %174 = vsyncadd %s168, %s173
          %s175 = smul.addr %s19, 128
          %s176 = scalar_lea.hbm %s2, %s175
          %s178 = sshll.u32 %s171, 4
          %s179 = int_to_ptr.vmem [resolvable:$true] %s178
          %181 = dma.hbm_to_vmem [thread:$0]  %s176, 128, %s179, %s168
        $region28: #{tpu_custom_call.1} parent=19 // pred_fallthru
          _
      $region20: #{tpu_custom_call.1} parent=5 // pred_fallthru
        _
      %p182 = scmp.le.s32.totalorder 1, %s19
      %p183 = scmp.lt.s32.totalorder %s19, 3
      %p184 = pnand %p182, %p183
      %p185 = pneg %p184
      // Predicated region
      $region29: #{tpu_custom_call.1} parent=5 // pred_check
        _
      $region30: #{tpu_custom_call.1} parent=5 // pred_check_branch
        %187 = sbr.rel (%p184) target = $region32
      $region31: #{tpu_custom_call.1} parent=5 // pred_region
        %s188 = ssub.s32 %s19, 1
        // Predicated region
        $region33: #{tpu_custom_call.1} parent=31 // pred_check
          %p189 = pneg %p40
        $region34: #{tpu_custom_call.1} parent=31 // pred_check_branch
          %191 = sbr.rel (%p189) target = $region36
        $region35: #{tpu_custom_call.1} parent=31 // pred_region
          %192 = dma.done [#allocation5], 16
        $region36: #{tpu_custom_call.1} parent=31 // pred_fallthru
          _
        %s193 = sand.u32 %s53, 1
        %s194 = scalar_lea.sflag [#allocation3], %s193
        %s195 = sand.u32 %s53, 1
        %s196 = smul.addr %s195, 8
        %s197 = scalar_lea.vmem [#allocation6], %s196
        // Predicated region
        $region37: #{tpu_custom_call.1} parent=31 // pred_check
          %p198 = pneg %p66
        $region38: #{tpu_custom_call.1} parent=31 // pred_check_branch
          %200 = sbr.rel (%p198) target = $region40
        $region39: #{tpu_custom_call.1} parent=31 // pred_region
          %201 = dma.done %s194, 128
        $region40: #{tpu_custom_call.1} parent=31 // pred_fallthru
          _
        %s202 = sand.u32 %s79, 1
        %s203 = scalar_lea.sflag [#allocation8], %s202
        %s204 = sand.u32 %s79, 1
        %s205 = smul.addr %s204, 8
        %s206 = scalar_lea.vmem [#allocation7], %s205
        // Predicated region
        $region41: #{tpu_custom_call.1} parent=31 // pred_check
          %p207 = pneg %p92
        $region42: #{tpu_custom_call.1} parent=31 // pred_check_branch
          %209 = sbr.rel (%p207) target = $region44
        $region43: #{tpu_custom_call.1} parent=31 // pred_region
          %210 = dma.done %s203, 128
        $region44: #{tpu_custom_call.1} parent=31 // pred_fallthru
          _
        %211 = sfence
        %p212 = pneg %p40
        %p213 = pneg %p37
        %s214 = sand.u32 %s53, 1
        %s215 = scalar_lea.sflag [#allocation3], %s214
        %s216 = sand.u32 %s53, 1
        %s217 = smul.addr %s216, 8
        %s218 = scalar_lea.vmem [#allocation6], %s217
        %p219 = pneg %p66
        %p220 = pneg %p63
        %s221 = sand.u32 %s79, 1
        %s222 = scalar_lea.sflag [#allocation8], %s221
        %s223 = sand.u32 %s79, 1
        %s224 = smul.addr %s223, 8
        %s225 = scalar_lea.vmem [#allocation7], %s224
        %p226 = pneg %p92
        %p227 = pneg %p89
        %p228 = pneg %p118
        %p229 = pneg %p115
        %s230 = sand.u32 %s105, 1
        %s231 = scalar_lea.sflag [#allocation4], %s230
        %s232 = sand.u32 %s105, 1
        %s233 = smul.addr %s232, 8
        %s234 = scalar_lea.vmem [#allocation9], %s233
        %s235 = sld [smem:[#allocation2]]
        %s236 = sld [smem:[#allocation2 + $0x1]]
        %s237 = sld [smem:[#allocation2 + $0x2]]
        %s238 = sld [smem:[#allocation2 + $0x3]]
        %v239 = vld [vmem:[%s197] sm:$0xff]
        %v240 = vld [vmem:[%s206] sm:$0xff]
        %v241 = vstv %s236
        %v242 = vmul.f32 %v241, %v239
        %v243 = vstv %s235
        %v244 = vadd.f32 %v243, %v242
        %v245 = vsub.f32 %v240, %v244
        %v246 = vmul.f32 %v245, %v245
        %v247 = vstv %s238
        %v248 = vmul.f32 %v246, %v247
        %v249 = vstv %s237
        %v250 = vadd.f32 %v249, %v248
        %v251 = vlog2.pop %v250
        %v252 = vmul.f32 %v251, 0.6931472
        %v253 = vmul.f32 %v252, -0.5
        %254 = vst [vmem:[%s234] sm:$0xff] %v253
        %s255 = sand.u32 %s105, 1
        %s256 = scalar_lea.sflag [#allocation4], %s255
        %s257 = sand.u32 %s105, 1
        %s258 = smul.addr %s257, 8
        %s259 = scalar_lea.vmem [#allocation9], %s258
        // Predicated region
        $region45: #{tpu_custom_call.1} parent=31 // pred_check
          %p260 = pneg %p115
        $region46: #{tpu_custom_call.1} parent=31 // pred_check_branch
          %262 = sbr.rel (%p260) target = $region48
        $region47: #{tpu_custom_call.1} parent=31 // pred_region
          %s264 = ssub.s32 128, 128
          %265 = vsyncadd %s256, %s264
          %s266 = smul.addr %s24, 128
          %s267 = scalar_lea.hbm %s3, %s266
          %s269 = sshll.u32 %s259, 4
          %s270 = int_to_ptr.vmem [resolvable:$true] %s269
          %272 = dma.vmem_to_hbm [thread:$0]  %s270, 128, %s267, %s256
        $region48: #{tpu_custom_call.1} parent=31 // pred_fallthru
          _
      $region32: #{tpu_custom_call.1} parent=5 // pred_fallthru
        _
      %p273 = scmp.le.s32.totalorder 2, %s19
      // Predicated region
      $region49: #{tpu_custom_call.1} parent=5 // pred_check
        %p274 = pneg %p273
      $region50: #{tpu_custom_call.1} parent=5 // pred_check_branch
        %276 = sbr.rel (%p274) target = $region52
      $region51: #{tpu_custom_call.1} parent=5 // pred_region
        %s277 = ssub.s32 %s19, 2
        // Predicated region
        $region53: #{tpu_custom_call.1} parent=51 // pred_check
          %p278 = pneg %p121
        $region54: #{tpu_custom_call.1} parent=51 // pred_check_branch
          %280 = sbr.rel (%p278) target = $region56
        $region55: #{tpu_custom_call.1} parent=51 // pred_region
          %s281 = sand.u32 %s106, 1
          %s282 = scalar_lea.sflag [#allocation4], %s281
          %s283 = sand.u32 %s106, 1
          %s284 = smul.addr %s283, 8
          %s285 = scalar_lea.vmem [#allocation9], %s284
          %286 = dma.done %s282, 128
        $region56: #{tpu_custom_call.1} parent=51 // pred_fallthru
          _
      $region52: #{tpu_custom_call.1} parent=5 // pred_fallthru
        _
    $region6: #{tpu_custom_call.1} parent=1 // loop_footer
      %s23 = sadd.s32 1, %s19
    $region7: #{tpu_custom_call.1} parent=1 // loop_footer_branch
      %18 = sbr.rel target = $region3
    $region8: #{tpu_custom_call.1} parent=1 // loop_exit
      _
    %287 = vsyncpa [#allocation3], 1
    %s288 = scalar_lea.sflag [#allocation3], 1
    %289 = vsyncpa %s288, 1
    %290 = vsyncpa [#allocation8], 1
    %s291 = scalar_lea.sflag [#allocation8], 1
    %292 = vsyncpa %s291, 1
    %293 = vsyncpa [#allocation4], 1
    %s294 = scalar_lea.sflag [#allocation4], 1
    %295 = vsyncpa %s294, 1
    %296 = vsyncpa [#allocation5], 1
    %s297 = scalar_lea.sflag [#allocation5], 1
    %298 = vsyncpa %s297, 1

</llo_original>
